<compile_context>
chip_gen: v5e
topology: v5e:2x2
jax: 0.10.0
libtpu: 0.0.40
codegen_flags: <defaults>
</compile_context>

<pallas_src>
import math

import jax
import jax.numpy as jnp
from jax.experimental import pallas as pl
from jax.experimental.pallas import tpu as pltpu


# ----------------------------------------------------------------------------- PE buffer
def make_positional_encoding(d_model: int, max_seq_length: int = 100) -> jnp.ndarray:
    """Sinusoidal PE buffer, shape (max_seq_length, d_model). Init-time glue (not hot path)."""
    position = jnp.arange(0, max_seq_length, dtype=jnp.float32)[:, None]      # (L, 1)
    div_term = jnp.exp(
        jnp.arange(0, d_model, 2, dtype=jnp.float32) * (-math.log(10000.0) / d_model)
    )                                                                          # (ceil(D/2),)
    angles = position * div_term                                               # (L, ceil(D/2))
    pe = jnp.zeros((max_seq_length, d_model), dtype=jnp.float32)
    pe = pe.at[:, 0::2].set(jnp.sin(angles))
    pe = pe.at[:, 1::2].set(jnp.cos(angles)[:, : d_model // 2])                # odd-D safe
    return pe


# ----------------------------------------------------------------------- chip-aware budgets
_CHIP_CONFIG_CACHE = None


def _chip_config():
    """Returns (target_block_bytes, vmem_limit_bytes, two_tensorcores)."""
    global _CHIP_CONFIG_CACHE
    if _CHIP_CONFIG_CACHE is not None:
        return _CHIP_CONFIG_CACHE

    kind = ""
    try:
        kind = jax.devices()[0].device_kind.lower()
    except Exception:
        pass
    two_tc = "7" in kind  # v7x: 2 TensorCores per chip sharing 64 MiB VMEM each

    vmem_bytes = None
    try:
        vmem_bytes = int(getattr(pltpu.get_tpu_info(), "vmem_capacity_bytes"))
    except Exception:
        vmem_bytes = None
    if vmem_bytes is None:
        vmem_bytes = (64 if two_tc else 128) * 1024 * 1024

    if vmem_bytes >= 96 * 1024 * 1024:   # v5e / v6e class (128 MiB VMEM): bigger blocks
        cfg = (4 * 1024 * 1024, 64 * 1024 * 1024, two_tc)
    else:                                 # v7x (64 MiB) or unknown: conservative
        cfg = (2 * 1024 * 1024, 32 * 1024 * 1024, two_tc)
    _CHIP_CONFIG_CACHE = cfg
    return cfg


# ------------------------------------------------------------------------------ tile chooser
def _choose_tiles(R: int, C: int, itemsize: int, target_bytes: int, two_tc: bool):
    """Pick (row_t, lane_t, grid) for an (R, C) slab.

    lane_t is a multiple of 128 (or the full extent when C is not 128-divisible);
    row_t is a multiple of 8 (or the full extent when R <= 8). Grids use cdiv, so the
    tiles never need to divide the array (ragged last block) and never degenerate.
    """
    if C % 128 == 0:
        rows_for_budget = min(max(R, 1), 8)
        lane_budget = max(128, ((target_bytes // (rows_for_budget * itemsize)) // 128) * 128)
        lane_t = min(C, lane_budget)
    else:
        # TODO(synk): could pad the lane axis up to a 128 multiple instead; for this
        # module (S*D small) a full-extent lane block is fine and always legal.
        lane_t = C

    if R <= 8:
        row_t = R                                             # full extent (legal)
    else:
        row_budget = max(8, ((target_bytes // (lane_t * itemsize)) // 8) * 8)
        row_t = min(row_budget, (R // 8) * 8)                 # multiple of 8, cdiv-ragged tail

    # v7x: make sure both TensorCores get a block; split rows first so lane tiles
    # (contiguous HBM bursts) stay maximally wide.
    if two_tc and pl.cdiv(C, lane_t) * pl.cdiv(R, row_t) < 2:
        if row_t >= 16 and row_t % 16 == 0:
            row_t //= 2
        elif lane_t >= 256 and lane_t % 256 == 0:
            lane_t //= 2

    grid = (pl.cdiv(C, lane_t), pl.cdiv(R, row_t))            # rows innermost (last axis)
    return row_t, lane_t, grid


# ---------------------------------------------------------------------------------- kernels
def _make_fused_pe_kernel(f: int, C: int, D: int, lane_t: int):
    """Kernel computing sinusoidal PE in-kernel (no pe operand). Slab layout: (B*f, S*D/f)."""
    neg_log_scale = -math.log(10000.0) / D

    def kernel(x_ref, o_ref):
        lane0 = pl.program_id(0) * lane_t                     # global lane offset of this block
        shape = x_ref.shape                                   # (row_t, lane_t)
        r = jax.lax.broadcasted_iota(jnp.int32, shape, 0)
        l = jax.lax.broadcasted_iota(jnp.int32, shape, 1)
        idx = l + lane0                                       # flat index within one batch elem
        if f > 1:
            idx = idx + (r & (f - 1)) * C                     # row offsets are multiples of f
        # Exact float index math (idx < 2**24): pos = idx // D, dim = idx % D.
        idx_f = idx.astype(jnp.float32)
        pos = jnp.floor(idx_f / D)
        dim = idx_f - pos * D
        half = jnp.floor(dim * 0.5)
        is_even = (dim - 2.0 * half) == 0.0
        inv_freq = jnp.exp((2.0 * half) * neg_log_scale)      # exp(-(dim - dim%2)*ln(1e4)/D)
        angle = pos * inv_freq
        pe = jnp.where(is_even, jnp.sin(angle), jnp.cos(angle))
        o_ref[...] = (x_ref[...] + pe).astype(o_ref.dtype)    # add in f32, cast on store

    return kernel


def _add_pe_kernel(x_ref, pe_ref, o_ref):
    # x_ref/o_ref: (row_t, lane_t); pe_ref: (1, lane_t) f32, broadcast over rows.
    o_ref[...] = (x_ref[...] + pe_ref[...]).astype(o_ref.dtype)


# ---------------------------------------------------------------------------------- wrappers
_SMALL_BATCH_FUSED_MAX = 4          # pe HBM stream is >=~10% of traffic only for small B
_fused_pe_ok = {"status": None}     # None: untried, False: sin/cos lowering unavailable


def _fused_forward(x, B, S, D, target_bytes, vmem_limit, two_tc):
    n = S * D
    # Fold each batch element into f rows so small-B tiles keep sublane occupancy high.
    f = next((c for c in (8, 4, 2) if n % (c * 128) == 0), 1)
    R, C = B * f, n // f
    itemsize = jnp.dtype(x.dtype).itemsize
    x2 = x.reshape(R, C)
    row_t, lane_t, grid = _choose_tiles(R, C, itemsize, target_bytes, two_tc)

    cost = pl.CostEstimate(flops=2 * R * C, transcendentals=3 * R * C,
                           bytes_accessed=2 * R * C * itemsize)
    out2 = pl.pallas_call(
        _make_fused_pe_kernel(f, C, D, lane_t),
        out_shape=jax.ShapeDtypeStruct((R, C), x.dtype),
        grid_spec=pltpu.PrefetchScalarGridSpec(
            num_scalar_prefetch=0,
            grid=grid,
            in_specs=[pl.BlockSpec((row_t, lane_t), lambda li, ri: (ri, li))],
            out_specs=pl.BlockSpec((row_t, lane_t), lambda li, ri: (ri, li)),
        ),
        compiler_params=pltpu.CompilerParams(
            dimension_semantics=("parallel", "parallel"),
            vmem_limit_bytes=vmem_limit,
        ),
        cost_estimate=cost,
        input_output_aliases={0: 0},          # in place when the caller donates x
    )(x2)
    return out2.reshape(B, S, D)


def _operand_forward(x, pe, B, S, D, target_bytes, vmem_limit, two_tc):
    n = S * D
    itemsize = jnp.dtype(x.dtype).itemsize
    x2 = x.reshape(B, n)                                       # lane-dense slab
    pe2 = pe[:S].astype(jnp.float32).reshape(1, n)             # keep f32: add in f32, cast on store
    row_t, lane_t, grid = _choose_tiles(B, n, itemsize, target_bytes, two_tc)

    cost = pl.CostEstimate(flops=B * n, transcendentals=0,
                           bytes_accessed=(2 * B + 1) * n * itemsize)
    out2 = pl.pallas_call(
        _add_pe_kernel,
        out_shape=jax.ShapeDtypeStruct((B, n), x.dtype),
        grid_spec=pltpu.PrefetchScalarGridSpec(
            num_scalar_prefetch=0,
            grid=grid,
            in_specs=[
                pl.BlockSpec((row_t, lane_t), lambda li, ri: (ri, li)),   # x tile
                pl.BlockSpec((1, lane_t), lambda li, ri: (0, li)),        # pe tile, resident
            ],
            out_specs=pl.BlockSpec((row_t, lane_t), lambda li, ri: (ri, li)),
        ),
        compiler_params=pltpu.CompilerParams(
            dimension_semantics=("parallel", "parallel"),
            vmem_limit_bytes=vmem_limit,
        ),
        cost_estimate=cost,
        input_output_aliases={0: 0},
    )(x2, pe2)
    return out2.reshape(B, S, D)


def positional_encoding_forward(x: jnp.ndarray, pe: jnp.ndarray) -> jnp.ndarray:
    """x: (B, S, D); pe: (max_seq_length, D). Returns x + pe[:S] (broadcast over B)."""
    B, S, D = x.shape
    L, D_pe = pe.shape
    if D_pe != D:
        raise ValueError(f"d_model mismatch: x has {D}, pe has {D_pe}")
    if S > L:
        raise ValueError(f"sequence length {S} exceeds max_seq_length {L}")

    target_bytes, vmem_limit, two_tc = _chip_config()

    if B <= _SMALL_BATCH_FUSED_MAX and _fused_pe_ok["status"] is not False:
        try:
            out = _fused_forward(x, B, S, D, target_bytes, vmem_limit, two_tc)
            _fused_pe_ok["status"] = True
            return out
        except Exception:
            # e.g. sin/cos transcendental lowering unavailable: fall back to the pe operand.
            _fused_pe_ok["status"] = False

    return _operand_forward(x, pe, B, S, D, target_bytes, vmem_limit, two_tc)


# -------------------------------------------------------------------------------------- main
if __name__ == "__main__":
    max_seq_length = 100

    # Case 1: small batch (in-kernel-PE path), shapes consistent with the module.
    B, S, D = 2, 8, 32
    x = jax.random.normal(jax.random.PRNGKey(0), (B, S, D), dtype=jnp.float32)
    pe = make_positional_encoding(D, max_seq_length)
    ref = x + pe[None, :S, :]
    out = jax.block_until_ready(positional_encoding_forward(x, pe))
    assert out.shape == (B, S, D)
    assert jnp.allclose(out, ref, atol=1e-4), "mismatch vs reference (small-batch path)"

    # Case 2: S*D not a multiple of 128 -> full-extent lane block fallback.
    S2 = 9
    x2 = jax.random.normal(jax.random.PRNGKey(1), (B, S2, D), dtype=jnp.float32)
    ref2 = x2 + pe[None, :S2, :]
    out2 = jax.block_until_ready(positional_encoding_forward(x2, pe))
    assert jnp.allclose(out2, ref2, atol=1e-4), "mismatch vs reference (non-128 lane path)"

    # Case 3: larger batch -> pe-operand path (pe streamed once, broadcast over >=8 rows).
    B3 = 16
    x3 = jax.random.normal(jax.random.PRNGKey(2), (B3, S, D), dtype=jnp.float32)
    ref3 = x3 + pe[None, :S, :]
    out3 = jax.block_until_ready(positional_encoding_forward(x3, pe))
    assert jnp.allclose(out3, ref3, atol=1e-6), "mismatch vs reference (pe-operand path)"

    print("KERNEL_OK")
</pallas_src>

<mosaic_0001>
module attributes {stable_mosaic.version = 11 : i64} {
  func.func @kernel(%arg0: i32, %arg1: i32, %arg2: memref<4x128xf32, #tpu.memory_space<vmem>>, %arg3: memref<4x128xf32, #tpu.memory_space<vmem>>) attributes {dimension_semantics = [#tpu.dimension_semantics<parallel>, #tpu.dimension_semantics<parallel>], iteration_bounds = array<i64: 1, 1>, scalar_prefetch = 0 : i64, scratch_operands = 0 : i64, tpu.core_type = #tpu.core_type<tc>, window_params = [{transform_indices = @transform_0, window_bounds = array<i64: 4, 128>}, {transform_indices = @transform_1, window_bounds = array<i64: 4, 128>}]} {
    %c128_i32 = arith.constant 128 : i32
    %0 = arith.muli %arg0, %c128_i32 : i32
    %1 = tpu.iota {dimensions = array<i32: 0>} : vector<4x128xi32>
    %2 = tpu.iota {dimensions = array<i32: 1>} : vector<4x128xi32>
    %3 = vector.broadcast %0 : i32 to vector<4x128xi32>
    %4 = arith.addi %2, %3 : vector<4x128xi32>
    %c1_i32 = arith.constant 1 : i32
    %5 = vector.broadcast %c1_i32 : i32 to vector<4x128xi32>
    %6 = arith.andi %1, %5 : vector<4x128xi32>
    %c128_i32_0 = arith.constant 128 : i32
    %7 = vector.broadcast %c128_i32_0 : i32 to vector<4x128xi32>
    %8 = arith.muli %6, %7 : vector<4x128xi32>
    %9 = arith.addi %4, %8 : vector<4x128xi32>
    %10 = arith.sitofp %9 : vector<4x128xi32> to vector<4x128xf32>
    %cst = arith.constant 3.200000e+01 : f32
    %11 = vector.broadcast %cst : f32 to vector<4x128xf32>
    %12 = arith.divf %10, %11 : vector<4x128xf32>
    %13 = math.floor %12 : vector<4x128xf32>
    %cst_1 = arith.constant 3.200000e+01 : f32
    %14 = vector.broadcast %cst_1 : f32 to vector<4x128xf32>
    %15 = arith.mulf %13, %14 : vector<4x128xf32>
    %16 = arith.subf %10, %15 : vector<4x128xf32>
    %cst_2 = arith.constant 5.000000e-01 : f32
    %17 = vector.broadcast %cst_2 : f32 to vector<4x128xf32>
    %18 = arith.mulf %16, %17 : vector<4x128xf32>
    %19 = math.floor %18 : vector<4x128xf32>
    %cst_3 = arith.constant 2.000000e+00 : f32
    %20 = vector.broadcast %cst_3 : f32 to vector<4x128xf32>
    %21 = arith.mulf %20, %19 : vector<4x128xf32>
    %22 = arith.subf %16, %21 : vector<4x128xf32>
    %cst_4 = arith.constant 0.000000e+00 : f32
    %23 = vector.broadcast %cst_4 : f32 to vector<4x128xf32>
    %24 = arith.cmpf oeq, %22, %23 : vector<4x128xf32>
    %cst_5 = arith.constant 2.000000e+00 : f32
    %25 = vector.broadcast %cst_5 : f32 to vector<4x128xf32>
    %26 = arith.mulf %25, %19 : vector<4x128xf32>
    %cst_6 = arith.constant -0.287823141 : f32
    %27 = vector.broadcast %cst_6 : f32 to vector<4x128xf32>
    %28 = arith.mulf %26, %27 : vector<4x128xf32>
    %29 = math.exp %28 : vector<4x128xf32>
    %30 = arith.mulf %13, %29 : vector<4x128xf32>
    %31 = math.sin %30 : vector<4x128xf32>
    %32 = math.cos %30 : vector<4x128xf32>
    %33 = arith.select %24, %31, %32 : vector<4x128xi1>, vector<4x128xf32>
    %c0 = arith.constant 0 : index
    %c0_7 = arith.constant 0 : index
    %34 = vector.load %arg2[%c0, %c0_7] : memref<4x128xf32, #tpu.memory_space<vmem>>, vector<4x128xf32>
    %35 = arith.addf %34, %33 : vector<4x128xf32>
    %c0_8 = arith.constant 0 : index
    %c0_9 = arith.constant 0 : index
    %36 = vector.load %arg3[%c0_8, %c0_9] : memref<4x128xf32, #tpu.memory_space<vmem>>, vector<4x128xf32>
    tpu.vector_store %arg3[%c0_8, %c0_9], %35 {strides = array<i32>} : memref<4x128xf32, #tpu.memory_space<vmem>>, vector<4x128xf32>,
    return
  }
  func.func @transform_0(%arg0: i32, %arg1: i32) -> (i32, i32) {
    %c0_i32 = arith.constant 0 : i32
    return %arg1, %arg0 : i32, i32
  }
  func.func @transform_1(%arg0: i32, %arg1: i32) -> (i32, i32) {
    %c0_i32 = arith.constant 0 : i32
    return %arg1, %arg0 : i32, i32
  }
}

module attributes {stable_mosaic.version = 11 : i64} {
  func.func @_add_pe_kernel(%arg0: i32, %arg1: i32, %arg2: memref<2x256xf32, #tpu.memory_space<vmem>>, %arg3: memref<1x256xf32, #tpu.memory_space<vmem>>, %arg4: memref<2x256xf32, #tpu.memory_space<vmem>>) attributes {dimension_semantics = [#tpu.dimension_semantics<parallel>, #tpu.dimension_semantics<parallel>], iteration_bounds = array<i64: 1, 1>, scalar_prefetch = 0 : i64, scratch_operands = 0 : i64, tpu.core_type = #tpu.core_type<tc>, window_params = [{transform_indices = @transform_0, window_bounds = array<i64: 2, 256>}, {transform_indices = @transform_1, window_bounds = array<i64: 1, 256>}, {transform_indices = @transform_2, window_bounds = array<i64: 2, 256>}]} {
    %c0 = arith.constant 0 : index
    %c0_0 = arith.constant 0 : index
    %0 = vector.load %arg2[%c0, %c0_0] : memref<2x256xf32, #tpu.memory_space<vmem>>, vector<2x256xf32>
    %c0_1 = arith.constant 0 : index
    %c0_2 = arith.constant 0 : index
    %1 = vector.load %arg3[%c0_1, %c0_2] : memref<1x256xf32, #tpu.memory_space<vmem>>, vector<1x256xf32>
    %2 = vector.broadcast %1 : vector<1x256xf32> to vector<2x256xf32>
    %3 = arith.addf %0, %2 : vector<2x256xf32>
    %c0_3 = arith.constant 0 : index
    %c0_4 = arith.constant 0 : index
    %4 = vector.load %arg4[%c0_3, %c0_4] : memref<2x256xf32, #tpu.memory_space<vmem>>, vector<2x256xf32>
    tpu.vector_store %arg4[%c0_3, %c0_4], %3 {strides = array<i32>} : memref<2x256xf32, #tpu.memory_space<vmem>>, vector<2x256xf32>,
    return
  }
  func.func @transform_0(%arg0: i32, %arg1: i32) -> (i32, i32) {
    %c0_i32 = arith.constant 0 : i32
    return %arg1, %arg0 : i32, i32
  }
  func.func @transform_1(%arg0: i32, %arg1: i32) -> (i32, i32) {
    %c0_i32 = arith.constant 0 : i32
    %c0_i32_0 = arith.constant 0 : i32
    return %c0_i32, %arg0 : i32, i32
  }
  func.func @transform_2(%arg0: i32, %arg1: i32) -> (i32, i32) {
    %c0_i32 = arith.constant 0 : i32
    return %arg1, %arg0 : i32, i32
  }
}

</mosaic_0001>

<llo_original>
// kernel: tpu_custom_call.1
$region0: #{tpu_custom_call.1}
  #allocation0 [shape = 'u32[]', space=smem, size = 0x4, offset = 0x4, fixed_abs, tag = 'smem constant byte address 0x4 - core index']
  #allocation1 [shape = 'u32[72,128]{1,0:T(1,128)}', space=vmem, size = 0x9000, scoped, tag = 'internal scratch']
  %s0 = inlined_call_operand.hbm [shape: f32[4,128], index: 0, kind: input, shape index: {}, may-alias: {0,1}]
  %s1 = inlined_call_operand.hbm [shape: f32[4,128], index: 1, kind: output, shape index: {}, may-alias: {0,1}]
  %s2 = sld [smem:[#allocation0]]
  $region18: #{tpu_custom_call.1} parent=0
    _
  %s4 = ssub.s32 1, %s2
  %s5 = scalar_select 0, %s4, %s2
  $region1: #{tpu_custom_call.1} parent=0
    #allocation2 [shape = 'u8[2048]{0}', space=vmem, size = 0x800, scoped, tag = 'input window, operand 0, single buffered']
    #allocation3 [shape = 's32[1]{0}', space=sflag, size = 0x4, scoped, tag = 'scoped memory for tpu_custom_call.1']
    #allocation4 [shape = 's32[1]{0}', space=sflag, size = 0x4, scoped, tag = 'scoped memory for tpu_custom_call.1']
    #allocation5 [shape = 'u8[2048]{0}', space=vmem, size = 0x800, scoped, tag = 'output window, operand 0, single buffered']
    %6 = vsyncpa [#allocation3], 0
    %7 = vsyncpa [#allocation4], 0
    // Predicated region
    $region2: #{tpu_custom_call.1} parent=1 // pred_check
      _
    $region3: #{tpu_custom_call.1} parent=1 // pred_check_branch
      %9 = sbr.rel (0) target = $region5
    $region4: #{tpu_custom_call.1} parent=1 // pred_region
      %11 = vsyncadd [#allocation3], 0
      %s13 = sshll.u32 %s0, 4
      %s14 = int_to_ptr.hbm [resolvable:$true] %s13
      %s15 = sshll.u32 [#allocation2], 4
      %s16 = int_to_ptr.vmem [resolvable:$true] %s15
      %18 = dma.hbm_to_vmem [thread:$0]  %s14, 64, %s16, [#allocation3]
    $region5: #{tpu_custom_call.1} parent=1 // pred_fallthru
      _
    // Predicated region
    $region6: #{tpu_custom_call.1} parent=1 // pred_check
      _
    $region7: #{tpu_custom_call.1} parent=1 // pred_check_branch
      %20 = sbr.rel (0) target = $region9
    $region8: #{tpu_custom_call.1} parent=1 // pred_region
      %22 = dma.done [#allocation3], 64
    $region9: #{tpu_custom_call.1} parent=1 // pred_fallthru
      _
    %s23 = smul.u32 0, 128
    %v24 = vlaneseq
    %v25 = vshrl.u32 %v24, 7
    %v26 = vlaneseq
    %v27 = vand.u32 %v26, 127
    %v28 = vstv %s23
    %v29 = vadd.s32 %v27, %v28
    %v30 = vand.u32 %v25, 1
    %v31 = vmul.u32 %v30, 128
    %v32 = vadd.s32 %v29, %v31
    %v33 = vcvt.s32.f32 %v32
    %v34 = vrcp.pop 32.0
    %v35 = vmul.f32 32.0, %v34
    %v36 = vsub.f32 1.0, %v35
    %v37 = vmul.f32 %v34, %v36
    %v38 = vadd.f32 %v34, %v37
    %vm39 = vweird.f32 %v34
    %v40 = vsel %vm39, %v34, %v38
    %v41 = vmul.f32 %v33, %v40
    %v42 = vfloor.f32 %v41
    %v43 = vmul.f32 %v42, 32.0
    %v44 = vsub.f32 %v33, %v43
    %v45 = vmul.f32 %v44, 0.5
    %v46 = vfloor.f32 %v45
    %v47 = vmul.f32 %v46, 2.0
    %v48 = vsub.f32 %v44, %v47
    %vm49 = vcmp.eq.f32.partialorder %v48, 0.0
    %v50 = vmul.f32 %v47, -0.28782314
    %v51 = vmul.f32 %v50, 1.442695
    %v52 = vpow.pop %v51
    %v53 = vmul.f32 %v42, %v52
    %v54 = vand.u32 2147483647, %v53
    %vm55 = vcmp.le.f32.partialorder %v54, 0.7853982
    %vm56 = vcmp.lt.s32.totalorder %v53, 0
    %v57 = vand.u32 %v53, 2139095040
    %v58 = vshrl.u32 %v57, 23
    %v59 = vsub.s32 %v58, 127
    %v60 = vand.u32 2147483647, %v53
    %v61 = vand.u32 %v60, 8388607
    %v62 = vor.u32 %v61, 8388608
    %v63 = vsub.s32 0, %v62
    %v64 = vadd.s32 %v59, 1
    %vm65 = vcmp.gt.s32.totalorder %v64, 0
    %v66 = vsel %vm65, %v64, 0
    %v67 = vshrl.u32 %v66, 5
    %v68 = vand.u32 %v66, 31
    %v69 = vsub.s32 32, %v68
    %v70 = vshrl.u32 683565275, %v69
    %v71 = vshll.u32 683565275, %v68
    %v72 = vshrl.u32 2475754826, %v69
    %v73 = vor.u32 %v71, %v72
    %v74 = vshll.u32 2475754826, %v68
    %v75 = vshrl.u32 2131351028, %v69
    %v76 = vor.u32 %v74, %v75
    %v77 = vshll.u32 2131351028, %v68
    %v78 = vshrl.u32 2102212464, %v69
    %v79 = vor.u32 %v77, %v78
    %v80 = vshll.u32 2102212464, %v68
    %v81 = vshrl.u32 920167782, %v69
    %v82 = vor.u32 %v80, %v81
    %v83 = vshll.u32 920167782, %v68
    %v84 = vshrl.u32 1326507024, %v69
    %v85 = vor.u32 %v83, %v84
    %vm86 = vcmp.lt.s32.totalorder %v67, 1
    %vm87 = vcmp.lt.s32.totalorder %v67, 2
    %vm88 = vcmp.lt.s32.totalorder %v67, 3
    %vm89 = vcmp.lt.s32.totalorder %v67, 4
    %v90 = vsel %vm86, %v70, %v73
    %v91 = vsel %vm89, %v79, 2102212464
    %v92 = vsel %vm88, %v76, %v91
    %v93 = vsel %vm87, %v90, %v92
    %v94 = vsel %vm86, %v73, %v76
    %v95 = vsel %vm89, %v82, 920167782
    %v96 = vsel %vm88, %v79, %v95
    %v97 = vsel %vm87, %v94, %v96
    %v98 = vsel %vm86, %v76, %v79
    %v99 = vsel %vm89, %v85, 1326507024
    %v100 = vsel %vm88, %v82, %v99
    %v101 = vsel %vm87, %v98, %v100
    %v102 = vshll.u32 %v62, 8
    %v103 = vand.u32 %v102, 65535
    %v104 = vshrl.u32 %v102, 16
    %v105 = vand.u32 %v101, 65535
    %v106 = vshrl.u32 %v101, 16
    %v107 = vmul.u32 %v103, %v105
    %v108 = vmul.u32 %v103, %v106
    %v109 = vmul.u32 %v104, %v105
    %v110 = vmul.u32 %v104, %v106
    %v111 = vshll.u32 %v108, 16
    %v112 = vshrl.u32 %v108, 16
    %v113 = vshll.u32 %v109, 16
    %v114 = vshrl.u32 %v109, 16
    %vm115 = vc.u32 %v107, %v111
    %v116 = vsel %vm115, 1, 0
    %v117 = vadd.s32 %v107, %v111
    %v118 = vadd.s32 %v110, %v116
    %vm119 = vc.u32 %v117, %v113
    %v120 = vsel %vm119, 1, 0
    %v121 = vadd.s32 %v117, %v113
    %v122 = vadd.s32 %v118, %v120
    %v123 = vadd.s32 %v122, %v112
    %v124 = vadd.s32 %v123, %v114
    %v125 = vand.u32 %v102, 65535
    %v126 = vshrl.u32 %v102, 16
    %v127 = vand.u32 %v97, 65535
    %v128 = vshrl.u32 %v97, 16
    %v129 = vmul.u32 %v125, %v127
    %v130 = vmul.u32 %v125, %v128
    %v131 = vmul.u32 %v126, %v127
    %v132 = vmul.u32 %v126, %v128
    %v133 = vshll.u32 %v130, 16
    %v134 = vshrl.u32 %v130, 16
    %v135 = vshll.u32 %v131, 16
    %v136 = vshrl.u32 %v131, 16
    %vm137 = vc.u32 %v129, %v133
    %v138 = vsel %vm137, 1, 0
    %v139 = vadd.s32 %v129, %v133
    %v140 = vadd.s32 %v132, %v138
    %vm141 = vc.u32 %v139, %v135
    %v142 = vsel %vm141, 1, 0
    %v143 = vadd.s32 %v139, %v135
    %v144 = vadd.s32 %v140, %v142
    %v145 = vadd.s32 %v144, %v134
    %v146 = vadd.s32 %v145, %v136
    %v147 = vmul.u32 %v102, %v93
    %v148 = vadd.s32 %v124, %v143
    %vm149 = vc.u32 %v124, %v143
    %v150 = vadd.s32 %v146, 1
    %v151 = vsel %vm149, %v150, %v146
    %v152 = vadd.s32 %v147, %v151
    %v153 = vadd.s32 %v152, 536870912
    %v154 = vshrl.u32 %v153, 30
    %v155 = vshll.u32 %v154, 30
    %v156 = vsub.s32 %v152, %v155
    %vm157 = vcmp.lt.s32.totalorder %v156, 0
    %v158 = vsub.s32 0, %v156
    %v159 = vsel %vm157, %v158, %v156
    %v160 = vclz %v159
    %v161 = vsub.s32 %v160, 2
    %vm162 = vcmp.gt.s32.totalorder 0, %v161
    %v163 = vsel %vm162, 0, %v161
    %v164 = vsub.s32 32, %v163
    %v165 = vshll.u32 %v156, %v163
    %v166 = vshrl.u32 %v148, %v164
    %v167 = vor.u32 %v165, %v166
    %v168 = vsub.s32 4294967266, %v163
    %v169 = vadd.s32 %v168, 127
    %v170 = vshll.u32 %v169, 23
    %v171 = vor.u32 4788187, %v170
    %v172 = vand.u32 2147483647, %v171
    %v174 = vcvt.s32.f32 %v167
    %v175 = vmul.f32 %v174, %v172
    %v176 = vxor.u32 %v175, 2147483648
    %v177 = vsel %vm56, %v176, %v175
    %v178 = vsub.s32 4, %v154
    %v179 = vsel %vm56, %v178, %v154
    %v180 = vsel %vm55, %v53, %v177
    %v181 = vsel %vm55, 0, %v179
    %v182 = vmul.f32 %v180, %v180
    %v183 = vmul.f32 %v182, -0.001358992
    %v184 = vadd.f32 %v183, 0.041655596
    %v185 = vmul.f32 %v182, %v184
    %v186 = vadd.f32 %v185, -0.4999988
    %v187 = vmul.f32 %v182, %v186
    %v188 = vadd.f32 1.0, %v187
    %v189 = vmul.f32 %v180, %v180
    %v190 = vmul.f32 %v189, -0.00019511016
    %v191 = vadd.f32 %v190, 0.008332121
    %v192 = vmul.f32 %v189, %v191
    %v193 = vadd.f32 %v192, -0.16666654
    %v194 = vmul.f32 %v189, %v193
    %v195 = vadd.f32 %v194, 1.0
    %v196 = vmul.f32 %v195, %v180
    %vm197 = vweird.f32 %v53
    %v198 = vadd.s32 %v181, 3
    %v199 = vand.u32 %v198, 3
    %vm200 = vcmp.lt.s32.totalorder %v199, 2
    %vm201 = vcmp.eq.s32.totalorder %v199, 0
    %v202 = vxor.u32 %v196, 2147483648
    %v203 = vsel %vm201, %v188, %v202
    %vm204 = vcmp.eq.s32.totalorder %v199, 2
    %v205 = vxor.u32 %v188, 2147483648
    %v206 = vsel %vm204, %v205, %v196
    %v207 = vsel %vm200, %v203, %v206
    %v208 = vsel %vm197, nan, %v207
    %v209 = vand.u32 2147483647, %v53
    %vm210 = vcmp.le.f32.partialorder %v209, 0.7853982
    %vm211 = vcmp.lt.s32.totalorder %v53, 0
    %v212 = vand.u32 %v53, 2139095040
    %v213 = vshrl.u32 %v212, 23
    %v214 = vsub.s32 %v213, 127
    %v215 = vand.u32 2147483647, %v53
    %v216 = vand.u32 %v215, 8388607
    %v217 = vor.u32 %v216, 8388608
    %v218 = vsub.s32 0, %v217
    %v219 = vadd.s32 %v214, 1
    %vm220 = vcmp.gt.s32.totalorder %v219, 0
    %v221 = vsel %vm220, %v219, 0
    %v222 = vshrl.u32 %v221, 5
    %v223 = vand.u32 %v221, 31
    %v224 = vsub.s32 32, %v223
    %v225 = vshrl.u32 683565275, %v224
    %v226 = vshll.u32 683565275, %v223
    %v227 = vshrl.u32 2475754826, %v224
    %v228 = vor.u32 %v226, %v227
    %v229 = vshll.u32 2475754826, %v223
    %v230 = vshrl.u32 2131351028, %v224
    %v231 = vor.u32 %v229, %v230
    %v232 = vshll.u32 2131351028, %v223
    %v233 = vshrl.u32 2102212464, %v224
    %v234 = vor.u32 %v232, %v233
    %v235 = vshll.u32 2102212464, %v223
    %v236 = vshrl.u32 920167782, %v224
    %v237 = vor.u32 %v235, %v236
    %v238 = vshll.u32 920167782, %v223
    %v239 = vshrl.u32 1326507024, %v224
    %v240 = vor.u32 %v238, %v239
    %vm241 = vcmp.lt.s32.totalorder %v222, 1
    %vm242 = vcmp.lt.s32.totalorder %v222, 2
    %vm243 = vcmp.lt.s32.totalorder %v222, 3
    %vm244 = vcmp.lt.s32.totalorder %v222, 4
    %v245 = vsel %vm241, %v225, %v228
    %v246 = vsel %vm244, %v234, 2102212464
    %v247 = vsel %vm243, %v231, %v246
    %v248 = vsel %vm242, %v245, %v247
    %v249 = vsel %vm241, %v228, %v231
    %v250 = vsel %vm244, %v237, 920167782
    %v251 = vsel %vm243, %v234, %v250
    %v252 = vsel %vm242, %v249, %v251
    %v253 = vsel %vm241, %v231, %v234
    %v254 = vsel %vm244, %v240, 1326507024
    %v255 = vsel %vm243, %v237, %v254
    %v256 = vsel %vm242, %v253, %v255
    %v257 = vshll.u32 %v217, 8
    %v258 = vand.u32 %v257, 65535
    %v259 = vshrl.u32 %v257, 16
    %v260 = vand.u32 %v256, 65535
    %v261 = vshrl.u32 %v256, 16
    %v262 = vmul.u32 %v258, %v260
    %v263 = vmul.u32 %v258, %v261
    %v264 = vmul.u32 %v259, %v260
    %v265 = vmul.u32 %v259, %v261
    %v266 = vshll.u32 %v263, 16
    %v267 = vshrl.u32 %v263, 16
    %v268 = vshll.u32 %v264, 16
    %v269 = vshrl.u32 %v264, 16
    %vm270 = vc.u32 %v262, %v266
    %v271 = vsel %vm270, 1, 0
    %v272 = vadd.s32 %v262, %v266
    %v273 = vadd.s32 %v265, %v271
    %vm274 = vc.u32 %v272, %v268
    %v275 = vsel %vm274, 1, 0
    %v276 = vadd.s32 %v272, %v268
    %v277 = vadd.s32 %v273, %v275
    %v278 = vadd.s32 %v277, %v267
    %v279 = vadd.s32 %v278, %v269
    %v280 = vand.u32 %v257, 65535
    %v281 = vshrl.u32 %v257, 16
    %v282 = vand.u32 %v252, 65535
    %v283 = vshrl.u32 %v252, 16
    %v284 = vmul.u32 %v280, %v282
    %v285 = vmul.u32 %v280, %v283
    %v286 = vmul.u32 %v281, %v282
    %v287 = vmul.u32 %v281, %v283
    %v288 = vshll.u32 %v285, 16
    %v289 = vshrl.u32 %v285, 16
    %v290 = vshll.u32 %v286, 16
    %v291 = vshrl.u32 %v286, 16
    %vm292 = vc.u32 %v284, %v288
    %v293 = vsel %vm292, 1, 0
    %v294 = vadd.s32 %v284, %v288
    %v295 = vadd.s32 %v287, %v293
    %vm296 = vc.u32 %v294, %v290
    %v297 = vsel %vm296, 1, 0
    %v298 = vadd.s32 %v294, %v290
    %v299 = vadd.s32 %v295, %v297
    %v300 = vadd.s32 %v299, %v289
    %v301 = vadd.s32 %v300, %v291
    %v302 = vmul.u32 %v257, %v248
    %v303 = vadd.s32 %v279, %v298
    %vm304 = vc.u32 %v279, %v298
    %v305 = vadd.s32 %v301, 1
    %v306 = vsel %vm304, %v305, %v301
    %v307 = vadd.s32 %v302, %v306
    %v308 = vadd.s32 %v307, 536870912
    %v309 = vshrl.u32 %v308, 30
    %v310 = vshll.u32 %v309, 30
    %v311 = vsub.s32 %v307, %v310
    %vm312 = vcmp.lt.s32.totalorder %v311, 0
    %v313 = vsub.s32 0, %v311
    %v314 = vsel %vm312, %v313, %v311
    %v315 = vclz %v314
    %v316 = vsub.s32 %v315, 2
    %vm317 = vcmp.gt.s32.totalorder 0, %v316
    %v318 = vsel %vm317, 0, %v316
    %v319 = vsub.s32 32, %v318
    %v320 = vshll.u32 %v311, %v318
    %v321 = vshrl.u32 %v303, %v319
    %v322 = vor.u32 %v320, %v321
    %v323 = vsub.s32 4294967266, %v318
    %v324 = vadd.s32 %v323, 127
    %v325 = vshll.u32 %v324, 23
    %v326 = vor.u32 4788187, %v325
    %v327 = vand.u32 2147483647, %v326
    %v329 = vcvt.s32.f32 %v322
    %v330 = vmul.f32 %v329, %v327
    %v331 = vxor.u32 %v330, 2147483648
    %v332 = vsel %vm211, %v331, %v330
    %v333 = vsub.s32 4, %v309
    %v334 = vsel %vm211, %v333, %v309
    %v335 = vsel %vm210, %v53, %v332
    %v336 = vsel %vm210, 0, %v334
    %v337 = vmul.f32 %v335, %v335
    %v338 = vmul.f32 %v337, -0.001358992
    %v339 = vadd.f32 %v338, 0.041655596
    %v340 = vmul.f32 %v337, %v339
    %v341 = vadd.f32 %v340, -0.4999988
    %v342 = vmul.f32 %v337, %v341
    %v343 = vadd.f32 1.0, %v342
    %v344 = vmul.f32 %v335, %v335
    %v345 = vmul.f32 %v344, -0.00019511016
    %v346 = vadd.f32 %v345, 0.008332121
    %v347 = vmul.f32 %v344, %v346
    %v348 = vadd.f32 %v347, -0.16666654
    %v349 = vmul.f32 %v344, %v348
    %v350 = vadd.f32 %v349, 1.0
    %v351 = vmul.f32 %v350, %v335
    %vm352 = vweird.f32 %v53
    %v353 = vand.u32 %v336, 3
    %vm354 = vcmp.lt.s32.totalorder %v353, 2
    %vm355 = vcmp.eq.s32.totalorder %v353, 0
    %v356 = vxor.u32 %v351, 2147483648
    %v357 = vsel %vm355, %v343, %v356
    %vm358 = vcmp.eq.s32.totalorder %v353, 2
    %v359 = vxor.u32 %v343, 2147483648
    %v360 = vsel %vm358, %v359, %v351
    %v361 = vsel %vm354, %v357, %v360
    %v362 = vsel %vm352, nan, %v361
    %v363 = vsel %vm49, %v208, %v362
    %v364 = vld [vmem:[#allocation2] sm:$0xf]
    %v365 = vadd.f32 %v364, %v363
    %366 = vst [vmem:[#allocation5] sm:$0xf] %v365
    // Predicated region
    $region10: #{tpu_custom_call.1} parent=1 // pred_check
      _
    $region11: #{tpu_custom_call.1} parent=1 // pred_check_branch
      %368 = sbr.rel (0) target = $region13
    $region12: #{tpu_custom_call.1} parent=1 // pred_region
      %370 = vsyncadd [#allocation4], 0
      %s372 = sshll.u32 [#allocation5], 4
      %s373 = int_to_ptr.vmem [resolvable:$true] %s372
      %s374 = sshll.u32 %s1, 4
      %s375 = int_to_ptr.hbm [resolvable:$true] %s374
      %377 = dma.vmem_to_hbm [thread:$0]  %s373, 64, %s375, [#allocation4]
    $region13: #{tpu_custom_call.1} parent=1 // pred_fallthru
      _
    // Predicated region
    $region14: #{tpu_custom_call.1} parent=1 // pred_check
      _
    $region15: #{tpu_custom_call.1} parent=1 // pred_check_branch
      %379 = sbr.rel (0) target = $region17
    $region16: #{tpu_custom_call.1} parent=1 // pred_region
      %381 = dma.done [#allocation4], 64
    $region17: #{tpu_custom_call.1} parent=1 // pred_fallthru
      _
    %382 = vsyncpa [#allocation3], 1
    %383 = vsyncpa [#allocation4], 1

// kernel: tpu_custom_call.1
$region0: #{tpu_custom_call.1}
  #allocation0 [shape = 'u32[]', space=smem, size = 0x4, offset = 0x4, fixed_abs, tag = 'smem constant byte address 0x4 - core index']
  #allocation1 [shape = 'u32[72,128]{1,0:T(1,128)}', space=vmem, size = 0x9000, scoped, tag = 'internal scratch']
  %s0 = inlined_call_operand.hbm [shape: f32[2,256], index: 0, kind: input, shape index: {}, may-alias: {0,2}]
  %s1 = inlined_call_operand.vmem [shape: f32[1,256], index: 1, kind: input, shape index: {}]
  %s2 = inlined_call_operand.hbm [shape: f32[2,256], index: 2, kind: output, shape index: {}, may-alias: {0,2}]
  %s3 = sld [smem:[#allocation0]]
  $region22: #{tpu_custom_call.1} parent=0
    _
  %s5 = ssub.s32 1, %s3
  %s6 = scalar_select 0, %s5, %s3
  $region1: #{tpu_custom_call.1} parent=0
    #allocation2 [shape = 'u8[2048]{0}', space=vmem, size = 0x800, scoped, tag = 'input window, operand 0, single buffered']
    #allocation3 [shape = 's32[1]{0}', space=sflag, size = 0x4, scoped, tag = 'scoped memory for tpu_custom_call.1']
    #allocation4 [shape = 's32[1]{0}', space=sflag, size = 0x4, scoped, tag = 'scoped memory for tpu_custom_call.1']
    #allocation5 [shape = 'u8[2048]{0}', space=vmem, size = 0x800, scoped, tag = 'output window, operand 0, single buffered']
    %7 = vsyncpa [#allocation3], 0
    %8 = vsyncpa [#allocation4], 0
    // Predicated region
    $region2: #{tpu_custom_call.1} parent=1 // pred_check
      _
    $region3: #{tpu_custom_call.1} parent=1 // pred_check_branch
      %10 = sbr.rel (0) target = $region5
    $region4: #{tpu_custom_call.1} parent=1 // pred_region
      %12 = vsyncadd [#allocation3], 0
      %s14 = sshll.u32 %s0, 4
      %s15 = int_to_ptr.hbm [resolvable:$true] %s14
      %s16 = sshll.u32 [#allocation2], 4
      %s17 = int_to_ptr.vmem [resolvable:$true] %s16
      %19 = dma.hbm_to_vmem [thread:$0]  %s15, 64, %s17, [#allocation3]
    $region5: #{tpu_custom_call.1} parent=1 // pred_fallthru
      _
    // Predicated region
    $region6: #{tpu_custom_call.1} parent=1 // pred_check
      _
    $region7: #{tpu_custom_call.1} parent=1 // pred_check_branch
      %21 = sbr.rel (0) target = $region9
    $region8: #{tpu_custom_call.1} parent=1 // pred_region
      _
    $region9: #{tpu_custom_call.1} parent=1 // pred_fallthru
      _
    // Predicated region
    $region10: #{tpu_custom_call.1} parent=1 // pred_check
      _
    $region11: #{tpu_custom_call.1} parent=1 // pred_check_branch
      %23 = sbr.rel (0) target = $region13
    $region12: #{tpu_custom_call.1} parent=1 // pred_region
      %25 = dma.done [#allocation3], 64
    $region13: #{tpu_custom_call.1} parent=1 // pred_fallthru
      _
    %v26 = vld [vmem:[#allocation2] sm:$0xf]
    %v27 = vld [vmem:[%s1] sm:$0x3]
    %v29 = vperm.slane %v27, 0
    %v30 = vperm.slane %v27, 1
    %v31 = vrot.slane %v30, 6
    %vm32 = vcmask 1041408
    %v33 = vsel %vm32, %v29, %v31
    %v35 = vadd.f32 %v26, %v33
    %36 = vst [vmem:[#allocation5] sm:$0xf] %v35
    // Predicated region
    $region14: #{tpu_custom_call.1} parent=1 // pred_check
      _
    $region15: #{tpu_custom_call.1} parent=1 // pred_check_branch
      %38 = sbr.rel (0) target = $region17
    $region16: #{tpu_custom_call.1} parent=1 // pred_region
      %40 = vsyncadd [#allocation4], 0
      %s42 = sshll.u32 [#allocation5], 4
      %s43 = int_to_ptr.vmem [resolvable:$true] %s42
      %s44 = sshll.u32 %s2, 4
      %s45 = int_to_ptr.hbm [resolvable:$true] %s44
      %47 = dma.vmem_to_hbm [thread:$0]  %s43, 64, %s45, [#allocation4]
    $region17: #{tpu_custom_call.1} parent=1 // pred_fallthru
      _
    // Predicated region
    $region18: #{tpu_custom_call.1} parent=1 // pred_check
      _
    $region19: #{tpu_custom_call.1} parent=1 // pred_check_branch
      %49 = sbr.rel (0) target = $region21
    $region20: #{tpu_custom_call.1} parent=1 // pred_region
      %51 = dma.done [#allocation4], 64
    $region21: #{tpu_custom_call.1} parent=1 // pred_fallthru
      _
    %52 = vsyncpa [#allocation3], 1
    %53 = vsyncpa [#allocation4], 1

</llo_original>
